<compile_context>
chip_gen: v7x
topology: tpu7x:2x2x1
jax: 0.10.0
libtpu: 0.0.40
codegen_flags: <defaults>
</compile_context>

<pallas_src>
import functools

import jax
import jax.numpy as jnp
from jax import lax
from jax.experimental import pallas as pl
from jax.experimental.pallas import tpu as pltpu


def _normalize_kernel(x_ref, o_ref, *, power):
    # Whole (tile_rows, D) block resident in VMEM; reduce over lanes (axis -1).
    x = x_ref[...]
    xf = x.astype(jnp.float32)  # accumulate in f32 (mandatory on v5e: no bf16 VALU/EUP)
    if power == 2:
        s = jnp.sum(xf * xf, axis=-1, keepdims=True)      # (tb, 1) f32
        inv = lax.rsqrt(s)                                 # EUP, own VLIW slot
        # Broadcast multiply in the input dtype: avoids keeping an upcast copy
        # of the whole block live just for the scaling write-out.
        o_ref[...] = (x * inv.astype(x.dtype)).astype(o_ref.dtype)
    else:
        if isinstance(power, int):
            # VALU multiply chain; keeps torch's signed result for negative x.
            xp = lax.integer_pow(xf, power)
        else:
            # Float exponent: exp/log path, NaN for negative bases (== torch).
            xp = jnp.power(xf, power)
        s = jnp.sum(xp, axis=-1, keepdims=True)            # (tb, 1) f32
        scale = jnp.power(s, -1.0 / power)                 # per-row only -> cheap
        o_ref[...] = (xf * scale).astype(o_ref.dtype)


def _block_target_bytes():
    """Generation-aware input-block byte target."""
    try:
        kind = jax.devices()[0].device_kind.lower()
    except Exception:
        kind = ""
    if "v5" in kind or "v4" in kind or "v3" in kind:
        # ~0.82 TB/s HBM: 1 MiB blocks already amortize the ~0.35 us/step cost.
        return 1 << 20
    # v6e / v7x: faster HBM -> bigger blocks; still << 32 MiB scoped VMEM once
    # double-buffered (2*in + 2*out + f32 temp ~ 6x block for f32, ~12x bf16).
    return 2 << 20


def _pick_tile_rows(B, D, itemsize):
    """Row-tile size: single step when the array is small, else ~target-size blocks."""
    align = {4: 8, 2: 16, 1: 32}.get(itemsize, 8)
    target = _block_target_bytes()
    if B * D * itemsize <= 2 * target:
        # One grid step covers everything; block dim == full array dim, so it
        # is exempt from the 8-sublane divisibility rule.
        return B
    rows = (target // (D * itemsize)) // align * align
    return max(align, rows)


def normalize(x, power=2, tile_rows=None):
    """L_p-normalize each row of x (shape (B, D)) along the feature axis."""
    B, D = x.shape
    itemsize = jnp.dtype(x.dtype).itemsize

    if tile_rows is None:
        tile_rows = _pick_tile_rows(B, D, itemsize)
    tile_rows = min(tile_rows, B)

    grid = (pl.cdiv(B, tile_rows),)  # ragged last block handled by Pallas

    kernel = functools.partial(_normalize_kernel, power=power)
    out = pl.pallas_call(
        kernel,
        out_shape=jax.ShapeDtypeStruct((B, D), x.dtype),
        grid=grid,
        in_specs=[pl.BlockSpec((tile_rows, D), lambda i: (i, 0))],
        out_specs=pl.BlockSpec((tile_rows, D), lambda i: (i, 0)),
        compiler_params=pltpu.CompilerParams(
            dimension_semantics=("parallel",),
            # Explicit override: v5e's scoped default is only 16 MiB.
            vmem_limit_bytes=32 << 20,
        ),
    )(x)
    return out


if __name__ == "__main__":
    key = jax.random.PRNGKey(0)

    # CoMatch-style embedding shape: non-power-of-two batch, low_dim = 64.
    # D=64 < 128 deliberately exercises the un-padded (full-dim) lane path.
    B, D = 160, 64
    x = jax.random.normal(key, (B, D), dtype=jnp.float32)

    out = jax.block_until_ready(normalize(x, power=2))
    ref = x / jnp.power(jnp.sum(jnp.power(x, 2.0), axis=1, keepdims=True), 0.5)
    assert out.shape == x.shape, "shape mismatch vs input"
    assert jnp.allclose(out, ref, atol=1e-5, rtol=1e-5), "mismatch vs reference"

    # Force the multi-step path with a ragged last block (200 = 3*64 + 8).
    x2 = jax.random.normal(jax.random.PRNGKey(1), (200, 128), dtype=jnp.float32)
    out2 = jax.block_until_ready(normalize(x2, power=2, tile_rows=64))
    ref2 = x2 / jnp.sqrt(jnp.sum(x2 * x2, axis=1, keepdims=True))
    assert jnp.allclose(out2, ref2, atol=1e-5, rtol=1e-5), "mismatch (ragged path)"

    # bf16 input: f32 accumulation, dtype-preserving broadcast multiply.
    x3 = jax.random.normal(jax.random.PRNGKey(2), (96, 64), dtype=jnp.bfloat16)
    out3 = jax.block_until_ready(normalize(x3, power=2))
    x3f = x3.astype(jnp.float32)
    ref3 = x3f / jnp.sqrt(jnp.sum(x3f * x3f, axis=1, keepdims=True))
    assert jnp.allclose(out3.astype(jnp.float32), ref3, atol=2e-2, rtol=2e-2), \
        "mismatch (bf16 path)"

    print("KERNEL_OK")
</pallas_src>

<mosaic_0001>
module attributes {stable_mosaic.version = 11 : i64} {
  func.func @_normalize_kernel(%arg0: i32, %arg1: memref<160x64xf32, #tpu.memory_space<vmem>>, %arg2: memref<160x64xf32, #tpu.memory_space<vmem>>) attributes {dimension_semantics = [#tpu.dimension_semantics<parallel>], iteration_bounds = array<i64: 1>, scalar_prefetch = 0 : i64, scratch_operands = 0 : i64, tpu.core_type = #tpu.core_type<tc>, window_params = [{transform_indices = @transform_0, window_bounds = array<i64: 160, 64>}, {transform_indices = @transform_1, window_bounds = array<i64: 160, 64>}]} {
    %c0 = arith.constant 0 : index
    %c0_0 = arith.constant 0 : index
    %0 = vector.load %arg1[%c0, %c0_0] : memref<160x64xf32, #tpu.memory_space<vmem>>, vector<160x64xf32>
    %1 = arith.mulf %0, %0 : vector<160x64xf32>
    %cst = arith.constant dense<0.000000e+00> : vector<160xf32>
    %2 = vector.multi_reduction <add>, %1, %cst [1] : vector<160x64xf32> to vector<160xf32>
    %3 = vector.shape_cast %2 : vector<160xf32> to vector<160x1xf32>
    %4 = math.rsqrt %3 : vector<160x1xf32>
    %5 = vector.broadcast %4 : vector<160x1xf32> to vector<160x64xf32>
    %6 = arith.mulf %0, %5 : vector<160x64xf32>
    %c0_1 = arith.constant 0 : index
    %c0_2 = arith.constant 0 : index
    %7 = vector.load %arg2[%c0_1, %c0_2] : memref<160x64xf32, #tpu.memory_space<vmem>>, vector<160x64xf32>
    tpu.vector_store %arg2[%c0_1, %c0_2], %6 {strides = array<i32>} : memref<160x64xf32, #tpu.memory_space<vmem>>, vector<160x64xf32>,
    return
  }
  func.func @transform_0(%arg0: i32) -> (i32, i32) {
    %c0_i32 = arith.constant 0 : i32
    %c0_i32_0 = arith.constant 0 : i32
    return %arg0, %c0_i32 : i32, i32
  }
  func.func @transform_1(%arg0: i32) -> (i32, i32) {
    %c0_i32 = arith.constant 0 : i32
    %c0_i32_0 = arith.constant 0 : i32
    return %arg0, %c0_i32 : i32, i32
  }
}

</mosaic_0001>

<llo_original>
// kernel: tpu_custom_call.1
$region0: #{tpu_custom_call.1}
  #allocation0 [shape = 'u32[]', space=smem, size = 0x4, offset = 0x4, fixed_abs, tag = 'smem constant byte address 0x4 - core index']
  #allocation1 [shape = 'u32[144,128]{1,0:T(1,128)}', space=vmem, size = 0x12000, scoped, tag = 'internal scratch']
  %s0 = inlined_call_operand.vmem [shape: f32[160,64], index: 0, kind: input, shape index: {}]
  %s1 = inlined_call_operand.vmem [shape: f32[160,64], index: 1, kind: output, shape index: {}]
  %s2 = sld [smem:[#allocation0]]
  $region14: #{tpu_custom_call.1} parent=0
    _
  %s4 = ssub.s32 1, %s2
  %s5 = scalar_select 0, %s4, %s2
  // Predicated region
  $region2: #{tpu_custom_call.1} parent=0 // pred_check
    _
  $region3: #{tpu_custom_call.1} parent=0 // pred_check_branch
    %7 = sbr.rel (0) target = $region5
  $region4: #{tpu_custom_call.1} parent=0 // pred_region
    _
  $region5: #{tpu_custom_call.1} parent=0 // pred_fallthru
    _
  %v8 = vld [vmem:[%s0] sm:$0xff]
  %v9 = vld [vmem:[%s0 + $0x8] sm:$0xff]
  %v10 = vld [vmem:[%s0 + $0x10] sm:$0xff]
  %v11 = vld [vmem:[%s0 + $0x18] sm:$0xff]
  %v12 = vld [vmem:[%s0 + $0x20] sm:$0xff]
  %v13 = vld [vmem:[%s0 + $0x28] sm:$0xff]
  %v14 = vld [vmem:[%s0 + $0x30] sm:$0xff]
  %v15 = vld [vmem:[%s0 + $0x38] sm:$0xff]
  %v16 = vld [vmem:[%s0 + $0x40] sm:$0xff]
  %v17 = vld [vmem:[%s0 + $0x48] sm:$0xff]
  %v18 = vld [vmem:[%s0 + $0x50] sm:$0xff]
  %v19 = vld [vmem:[%s0 + $0x58] sm:$0xff]
  %v20 = vld [vmem:[%s0 + $0x60] sm:$0xff]
  %v21 = vld [vmem:[%s0 + $0x68] sm:$0xff]
  %v22 = vld [vmem:[%s0 + $0x70] sm:$0xff]
  %v23 = vld [vmem:[%s0 + $0x78] sm:$0xff]
  %v24 = vld [vmem:[%s0 + $0x80] sm:$0xff]
  %v25 = vld [vmem:[%s0 + $0x88] sm:$0xff]
  %v26 = vld [vmem:[%s0 + $0x90] sm:$0xff]
  %v27 = vld [vmem:[%s0 + $0x98] sm:$0xff]
  %v28 = vmul.f32 %v8, %v8
  %v29 = vmul.f32 %v9, %v9
  %v30 = vmul.f32 %v10, %v10
  %v31 = vmul.f32 %v11, %v11
  %v32 = vmul.f32 %v12, %v12
  %v33 = vmul.f32 %v13, %v13
  %v34 = vmul.f32 %v14, %v14
  %v35 = vmul.f32 %v15, %v15
  %v36 = vmul.f32 %v16, %v16
  %v37 = vmul.f32 %v17, %v17
  %v38 = vmul.f32 %v18, %v18
  %v39 = vmul.f32 %v19, %v19
  %v40 = vmul.f32 %v20, %v20
  %v41 = vmul.f32 %v21, %v21
  %v42 = vmul.f32 %v22, %v22
  %v43 = vmul.f32 %v23, %v23
  %v44 = vmul.f32 %v24, %v24
  %v45 = vmul.f32 %v25, %v25
  %v46 = vmul.f32 %v26, %v26
  %v47 = vmul.f32 %v27, %v27
  %vm48 = vcmask 523264
  %v49 = vsel %vm48, %v28, 0.0
  %50 = vadd.xlane.f32.xlu0 %v49
  %v51 = vpop.xlane.xlu0 %50
  %v52 = vsel %vm48, %v29, 0.0
  %53 = vadd.xlane.f32.xlu0 %v52
  %v54 = vpop.xlane.xlu0 %53
  %v55 = vsel %vm48, %v30, 0.0
  %56 = vadd.xlane.f32.xlu0 %v55
  %v57 = vpop.xlane.xlu0 %56
  %v58 = vsel %vm48, %v31, 0.0
  %59 = vadd.xlane.f32.xlu0 %v58
  %v60 = vpop.xlane.xlu0 %59
  %v61 = vsel %vm48, %v32, 0.0
  %62 = vadd.xlane.f32.xlu0 %v61
  %v63 = vpop.xlane.xlu0 %62
  %v64 = vsel %vm48, %v33, 0.0
  %65 = vadd.xlane.f32.xlu0 %v64
  %v66 = vpop.xlane.xlu0 %65
  %v67 = vsel %vm48, %v34, 0.0
  %68 = vadd.xlane.f32.xlu0 %v67
  %v69 = vpop.xlane.xlu0 %68
  %v70 = vsel %vm48, %v35, 0.0
  %71 = vadd.xlane.f32.xlu0 %v70
  %v72 = vpop.xlane.xlu0 %71
  %v73 = vsel %vm48, %v36, 0.0
  %74 = vadd.xlane.f32.xlu0 %v73
  %v75 = vpop.xlane.xlu0 %74
  %v76 = vsel %vm48, %v37, 0.0
  %77 = vadd.xlane.f32.xlu0 %v76
  %v78 = vpop.xlane.xlu0 %77
  %v79 = vsel %vm48, %v38, 0.0
  %80 = vadd.xlane.f32.xlu0 %v79
  %v81 = vpop.xlane.xlu0 %80
  %v82 = vsel %vm48, %v39, 0.0
  %83 = vadd.xlane.f32.xlu0 %v82
  %v84 = vpop.xlane.xlu0 %83
  %v85 = vsel %vm48, %v40, 0.0
  %86 = vadd.xlane.f32.xlu0 %v85
  %v87 = vpop.xlane.xlu0 %86
  %v88 = vsel %vm48, %v41, 0.0
  %89 = vadd.xlane.f32.xlu0 %v88
  %v90 = vpop.xlane.xlu0 %89
  %v91 = vsel %vm48, %v42, 0.0
  %92 = vadd.xlane.f32.xlu0 %v91
  %v93 = vpop.xlane.xlu0 %92
  %v94 = vsel %vm48, %v43, 0.0
  %95 = vadd.xlane.f32.xlu0 %v94
  %v96 = vpop.xlane.xlu0 %95
  %v97 = vsel %vm48, %v44, 0.0
  %98 = vadd.xlane.f32.xlu0 %v97
  %v99 = vpop.xlane.xlu0 %98
  %v100 = vsel %vm48, %v45, 0.0
  %101 = vadd.xlane.f32.xlu0 %v100
  %v102 = vpop.xlane.xlu0 %101
  %v103 = vsel %vm48, %v46, 0.0
  %104 = vadd.xlane.f32.xlu0 %v103
  %v105 = vpop.xlane.xlu0 %104
  %v106 = vsel %vm48, %v47, 0.0
  %107 = vadd.xlane.f32.xlu0 %v106
  %v108 = vpop.xlane.xlu0 %107
  %v109 = vrsqrt.pop %v51
  %v110 = vrsqrt.pop %v54
  %v111 = vrsqrt.pop %v57
  %v112 = vrsqrt.pop %v60
  %v113 = vrsqrt.pop %v63
  %v114 = vrsqrt.pop %v66
  %v115 = vrsqrt.pop %v69
  %v116 = vrsqrt.pop %v72
  %v117 = vrsqrt.pop %v75
  %v118 = vrsqrt.pop %v78
  %v119 = vrsqrt.pop %v81
  %v120 = vrsqrt.pop %v84
  %v121 = vrsqrt.pop %v87
  %v122 = vrsqrt.pop %v90
  %v123 = vrsqrt.pop %v93
  %v124 = vrsqrt.pop %v96
  %v125 = vrsqrt.pop %v99
  %v126 = vrsqrt.pop %v102
  %v127 = vrsqrt.pop %v105
  %v128 = vrsqrt.pop %v108
  %v129 = vmul.f32 %v8, %v109
  %v130 = vmul.f32 %v9, %v110
  %v131 = vmul.f32 %v10, %v111
  %v132 = vmul.f32 %v11, %v112
  %v133 = vmul.f32 %v12, %v113
  %v134 = vmul.f32 %v13, %v114
  %v135 = vmul.f32 %v14, %v115
  %v136 = vmul.f32 %v15, %v116
  %v137 = vmul.f32 %v16, %v117
  %v138 = vmul.f32 %v17, %v118
  %v139 = vmul.f32 %v18, %v119
  %v140 = vmul.f32 %v19, %v120
  %v141 = vmul.f32 %v20, %v121
  %v142 = vmul.f32 %v21, %v122
  %v143 = vmul.f32 %v22, %v123
  %v144 = vmul.f32 %v23, %v124
  %v145 = vmul.f32 %v24, %v125
  %v146 = vmul.f32 %v25, %v126
  %v147 = vmul.f32 %v26, %v127
  %v148 = vmul.f32 %v27, %v128
  %149 = vst.msk [vmem:[%s1] sm:$0xff] %vm48, %v129
  %150 = vst.msk [vmem:[%s1 + $0x8] sm:$0xff] %vm48, %v130
  %151 = vst.msk [vmem:[%s1 + $0x10] sm:$0xff] %vm48, %v131
  %152 = vst.msk [vmem:[%s1 + $0x18] sm:$0xff] %vm48, %v132
  %153 = vst.msk [vmem:[%s1 + $0x20] sm:$0xff] %vm48, %v133
  %154 = vst.msk [vmem:[%s1 + $0x28] sm:$0xff] %vm48, %v134
  %155 = vst.msk [vmem:[%s1 + $0x30] sm:$0xff] %vm48, %v135
  %156 = vst.msk [vmem:[%s1 + $0x38] sm:$0xff] %vm48, %v136
  %157 = vst.msk [vmem:[%s1 + $0x40] sm:$0xff] %vm48, %v137
  %158 = vst.msk [vmem:[%s1 + $0x48] sm:$0xff] %vm48, %v138
  %159 = vst.msk [vmem:[%s1 + $0x50] sm:$0xff] %vm48, %v139
  %160 = vst.msk [vmem:[%s1 + $0x58] sm:$0xff] %vm48, %v140
  %161 = vst.msk [vmem:[%s1 + $0x60] sm:$0xff] %vm48, %v141
  %162 = vst.msk [vmem:[%s1 + $0x68] sm:$0xff] %vm48, %v142
  %163 = vst.msk [vmem:[%s1 + $0x70] sm:$0xff] %vm48, %v143
  %164 = vst.msk [vmem:[%s1 + $0x78] sm:$0xff] %vm48, %v144
  %165 = vst.msk [vmem:[%s1 + $0x80] sm:$0xff] %vm48, %v145
  %166 = vst.msk [vmem:[%s1 + $0x88] sm:$0xff] %vm48, %v146
  %167 = vst.msk [vmem:[%s1 + $0x90] sm:$0xff] %vm48, %v147
  %168 = vst.msk [vmem:[%s1 + $0x98] sm:$0xff] %vm48, %v148
  // Predicated region
  $region6: #{tpu_custom_call.1} parent=0 // pred_check
    _
  $region7: #{tpu_custom_call.1} parent=0 // pred_check_branch
    %170 = sbr.rel (0) target = $region9
  $region8: #{tpu_custom_call.1} parent=0 // pred_region
    _
  $region9: #{tpu_custom_call.1} parent=0 // pred_fallthru
    _
  // Predicated region
  $region10: #{tpu_custom_call.1} parent=0 // pred_check
    _
  $region11: #{tpu_custom_call.1} parent=0 // pred_check_branch
    %172 = sbr.rel (0) target = $region13
  $region12: #{tpu_custom_call.1} parent=0 // pred_region
    _
  $region13: #{tpu_custom_call.1} parent=0 // pred_fallthru
    _

</llo_original>
